<compile_context>
chip_gen: v7x
topology: tpu7x:2x2x1
jax: 0.10.0
libtpu: 0.0.40
codegen_flags: <defaults>
</compile_context>

<pallas_src>
import numpy as np
import jax
import jax.numpy as jnp
from jax.experimental import pallas as pl
from jax.experimental.pallas import tpu as pltpu

NUM_QUBITS = 4
NUM_ENT_LAYERS = 3
CLASSICAL_DIM = 10
DIM = 2 ** NUM_QUBITS  # 16 basis states


# ----------------------------------------------------------------------------
# Host-side basis tables (used for folding + the pure-JAX reference).
# ----------------------------------------------------------------------------
_BITS_F32 = np.zeros((NUM_QUBITS, DIM), dtype=np.float32)  # bit of wire q in state s
_ZVALS = np.zeros((DIM, NUM_QUBITS), dtype=np.float32)     # +1/-1 for PauliZ expval
_PH_RE = np.zeros((1, DIM), dtype=np.float32)              # Re[(-i)^popcount(s)]
_PH_IM = np.zeros((1, DIM), dtype=np.float32)              # Im[(-i)^popcount(s)]
for _st in range(DIM):
    _pc = 0
    for _q in range(NUM_QUBITS):
        _b = (_st >> (NUM_QUBITS - 1 - _q)) & 1
        _BITS_F32[_q, _st] = float(_b)
        _ZVALS[_st, _q] = 1.0 - 2.0 * _b
        _pc += _b
    _phase = (-1j) ** _pc
    _PH_RE[0, _st] = float(np.real(_phase))
    _PH_IM[0, _st] = float(np.imag(_phase))


# ----------------------------------------------------------------------------
# Host-side: fixed 16x16 entangler unitary (real: RY rotations + CNOT ring).
# ----------------------------------------------------------------------------
def _ry(theta):
    c, s = np.cos(theta / 2.0), np.sin(theta / 2.0)
    return np.array([[c, -s], [s, c]], dtype=np.float64)


def _kron_all(mats):
    out = np.array([[1.0]], dtype=np.float64)
    for m in mats:
        out = np.kron(out, m)
    return out


def _cnot(control, target, n):
    dim = 2 ** n
    m = np.zeros((dim, dim), dtype=np.float64)
    for st in range(dim):
        cbit = (st >> (n - 1 - control)) & 1
        dst = st ^ (1 << (n - 1 - target)) if cbit else st
        m[dst, st] = 1.0
    return m


def build_entangler(thetas):
    """W_ent for L BasicEntanglerLayers-style layers (RY rotations + CNOT ring)."""
    L, n = thetas.shape
    dim = 2 ** n
    W = np.eye(dim, dtype=np.float64)
    for layer in range(L):
        R = _kron_all([_ry(thetas[layer, q]) for q in range(n)])
        U = R
        for q in range(n):
            U = _cnot(q, (q + 1) % n, n) @ U
        W = U @ W
    return W  # real-valued


# ----------------------------------------------------------------------------
# Host-side folding of constant linear pieces (phases, Z readout, fc2),
# stored in feature-major (transposed) layout for the kernel.
# ----------------------------------------------------------------------------
def fold_params(w1, b1, w2, b2, w_ent):
    """w1:(Q,Din) b1:(Q,) w2:(Dout,Q) b2:(Dout,) w_ent:(S,S) -> kernel params."""
    w1f = np.asarray(w1, dtype=np.float32)                          # (Q, Din)
    b1c = np.asarray(b1, dtype=np.float32).reshape(NUM_QUBITS, 1)   # (Q, 1)
    went_t = np.asarray(w_ent, dtype=np.float32).T                  # (S, S)
    # psi_re = amp @ (diag(ph_re) @ W_ent^T), same for im; stack and transpose
    # so the kernel computes psi^T = wcat_t @ amp^T in one push.
    wcat = np.concatenate(
        [_PH_RE.reshape(DIM, 1) * went_t, _PH_IM.reshape(DIM, 1) * went_t],
        axis=1).astype(np.float32)                                  # (S, 2S)
    wcat_t = np.ascontiguousarray(wcat.T)                           # (2S, S)
    # out = probs @ (zvals @ W2^T) + b2 ; transposed -> zw2^T (Dout, S)
    zw2 = (_ZVALS @ np.asarray(w2, dtype=np.float32).T)             # (S, Dout)
    zw2_t = np.ascontiguousarray(zw2.T).astype(np.float32)          # (Dout, S)
    b2c = np.asarray(b2, dtype=np.float32).reshape(CLASSICAL_DIM, 1)
    return (jnp.asarray(w1f), jnp.asarray(b1c), jnp.asarray(wcat_t),
            jnp.asarray(zw2_t), jnp.asarray(b2c))


# ----------------------------------------------------------------------------
# Pallas kernel: fc1 -> relu -> 4-qubit circuit sim -> fc2, fully fused,
# feature-major layout (features on sublanes, batch on lanes).
# ----------------------------------------------------------------------------
def qnn_kernel(xT_ref, w1_ref, b1_ref, wcatT_ref, zw2T_ref, b2_ref, outT_ref):
    xT = xT_ref[...]                                               # (Din, TB)

    # fc1 + relu -> RX rotation angles.
    h = jnp.dot(w1_ref[...], xT, preferred_element_type=jnp.float32) + b1_ref[...]
    h = jnp.maximum(h, 0.0)                                        # (Q, TB)

    # AngleEmbedding (RX) on |0..0>: separable product state; magnitudes are
    # real, the global (-i)^popcount phase is folded into wcatT.
    c = jnp.cos(0.5 * h)                                           # (Q, TB)
    s = jnp.sin(0.5 * h)                                           # (Q, TB)

    # Basis-state bit of qubit q (MSB-first) generated from an iota.
    state = jax.lax.broadcasted_iota(jnp.int32, (DIM, 1), 0)       # (S, 1)
    amp = None
    for q in range(NUM_QUBITS):                                    # static unroll (4)
        bq = ((state >> (NUM_QUBITS - 1 - q)) & 1).astype(jnp.float32)  # (S, 1)
        cq = c[q:q + 1, :]                                         # (1, TB)
        dq = s[q:q + 1, :] - cq                                    # (1, TB)
        fac = cq + bq * dq                                         # bit ? s : c
        amp = fac if amp is None else amp * fac                    # (S, TB)

    # One matmul gives stacked [psi_re ; psi_im] (phases folded into wcatT).
    psi = jnp.dot(wcatT_ref[...], amp, preferred_element_type=jnp.float32)  # (2S, TB)
    p2 = psi * psi
    probs = p2[:DIM, :] + p2[DIM:, :]                              # (S, TB) sublane slice

    # PauliZ readout + fc2 folded into a single matmul.
    outT_ref[...] = (jnp.dot(zw2T_ref[...], probs,
                             preferred_element_type=jnp.float32) + b2_ref[...])


def qnn_forward(x, folded_params, *, block_batch=2048):
    B, din = x.shape
    xT = x.T                                                       # (Din, B)

    # Lane-tile over batch: multiple of 128 (or the full batch when small so
    # the block equals the array dim), capped at ~B/2 so the parallel axis has
    # >= 2 grid steps and both v7x TensorCores get work.
    if B <= 128:
        tb = B
    else:
        half = max(128, (((B + 1) // 2) // 128) * 128)
        tb = max(128, (min(block_batch, half) // 128) * 128)
    grid = (pl.cdiv(B, tb),)

    flops = 2 * B * (din * NUM_QUBITS + (2 * DIM) * DIM + DIM * CLASSICAL_DIM)
    bytes_accessed = 4 * B * (din + CLASSICAL_DIM) + sum(
        4 * int(np.prod(p.shape)) for p in folded_params)
    cost = pl.CostEstimate(flops=flops,
                           transcendentals=2 * B * NUM_QUBITS,
                           bytes_accessed=bytes_accessed)

    in_specs = [pl.BlockSpec((din, tb), lambda i: (0, i))]
    in_specs += [pl.BlockSpec(p.shape, lambda i: (0, 0)) for p in folded_params]

    # NOTE: per-step VMEM (x/out blocks + temps) is well under the scoped
    # default on v5e/v6e/v7x at tb<=2048, so no vmem_limit_bytes override.
    outT = pl.pallas_call(
        qnn_kernel,
        out_shape=jax.ShapeDtypeStruct((CLASSICAL_DIM, B), jnp.float32),
        grid=grid,
        in_specs=in_specs,
        out_specs=pl.BlockSpec((CLASSICAL_DIM, tb), lambda i: (0, i)),
        compiler_params=pltpu.CompilerParams(
            dimension_semantics=("parallel",)),
        cost_estimate=cost,
    )(xT, *folded_params)
    return outT.T                                                  # (B, Dout)


# ----------------------------------------------------------------------------
# Pure-JAX reference (unfolded path) for correctness check.
# ----------------------------------------------------------------------------
def qnn_reference(x, w1, b1, w2, b2, w_ent):
    h = jnp.maximum(x @ jnp.asarray(w1).T + jnp.asarray(b1), 0.0)
    c = jnp.cos(0.5 * h)
    s = jnp.sin(0.5 * h)
    bits = jnp.asarray(_BITS_F32)
    amp = jnp.ones((x.shape[0], DIM), jnp.float32)
    for q in range(NUM_QUBITS):
        bq = bits[q:q + 1, :]
        amp = amp * (bq * s[:, q:q + 1] + (1.0 - bq) * c[:, q:q + 1])
    went_t = jnp.asarray(np.asarray(w_ent, dtype=np.float32).T)
    psi_re = (amp * jnp.asarray(_PH_RE)) @ went_t
    psi_im = (amp * jnp.asarray(_PH_IM)) @ went_t
    probs = psi_re ** 2 + psi_im ** 2
    expz = probs @ jnp.asarray(_ZVALS)
    return expz @ jnp.asarray(w2).T + jnp.asarray(b2)


if __name__ == "__main__":
    key = jax.random.PRNGKey(0)
    k_x, k_w1, k_b1, k_w2, k_b2 = jax.random.split(key, 5)

    # fc1: Linear(10 -> 4)   fc2: Linear(4 -> 10)   (PyTorch weight is (out, in))
    w1 = 0.1 * jax.random.normal(k_w1, (NUM_QUBITS, CLASSICAL_DIM), jnp.float32)
    b1 = 0.1 * jax.random.normal(k_b1, (NUM_QUBITS,), jnp.float32)
    w2 = 0.1 * jax.random.normal(k_w2, (CLASSICAL_DIM, NUM_QUBITS), jnp.float32)
    b2 = 0.1 * jax.random.normal(k_b2, (CLASSICAL_DIM,), jnp.float32)

    # Deterministic RY angles for the 3 entangler layers (source had none).
    thetas = 0.1 * (np.arange(NUM_ENT_LAYERS * NUM_QUBITS, dtype=np.float64) + 1.0)
    thetas = thetas.reshape(NUM_ENT_LAYERS, NUM_QUBITS)
    w_ent = build_entangler(thetas)                                # (16, 16) real

    folded = fold_params(np.asarray(w1), np.asarray(b1),
                         np.asarray(w2), np.asarray(b2), w_ent)

    # Small single-block case (block == full batch dim).
    x_small = jax.random.normal(k_x, (8, CLASSICAL_DIM), dtype=jnp.float32)
    out_small = jax.block_until_ready(qnn_forward(x_small, folded))
    ref_small = qnn_reference(x_small, w1, b1, w2, b2, w_ent)
    np.testing.assert_allclose(np.asarray(out_small), np.asarray(ref_small),
                               rtol=1e-3, atol=1e-3)

    # Multi-step + partial-tile case (tb=128, 3 grid steps, last tile masked).
    x_big = jax.random.normal(k_x, (300, CLASSICAL_DIM), dtype=jnp.float32)
    out_big = jax.block_until_ready(qnn_forward(x_big, folded))
    ref_big = qnn_reference(x_big, w1, b1, w2, b2, w_ent)
    np.testing.assert_allclose(np.asarray(out_big), np.asarray(ref_big),
                               rtol=1e-3, atol=1e-3)

    print("KERNEL_OK")
</pallas_src>

<mosaic_0001>
module attributes {stable_mosaic.version = 11 : i64} {
  func.func @qnn_kernel(%arg0: i32, %arg1: memref<10x8xf32, #tpu.memory_space<vmem>>, %arg2: memref<4x10xf32, #tpu.memory_space<vmem>>, %arg3: memref<4x1xf32, #tpu.memory_space<vmem>>, %arg4: memref<32x16xf32, #tpu.memory_space<vmem>>, %arg5: memref<10x16xf32, #tpu.memory_space<vmem>>, %arg6: memref<10x1xf32, #tpu.memory_space<vmem>>, %arg7: memref<10x8xf32, #tpu.memory_space<vmem>>) attributes {dimension_semantics = [#tpu.dimension_semantics<parallel>], iteration_bounds = array<i64: 1>, scalar_prefetch = 0 : i64, scratch_operands = 0 : i64, tpu.core_type = #tpu.core_type<tc>, window_params = [{transform_indices = @transform_0, window_bounds = array<i64: 10, 8>}, {pipeline_mode = #tpu.pipeline_mode<synchronous>, transform_indices = @transform_1, window_bounds = array<i64: 4, 10>}, {pipeline_mode = #tpu.pipeline_mode<synchronous>, transform_indices = @transform_2, window_bounds = array<i64: 4, 1>}, {pipeline_mode = #tpu.pipeline_mode<synchronous>, transform_indices = @transform_3, window_bounds = array<i64: 32, 16>}, {pipeline_mode = #tpu.pipeline_mode<synchronous>, transform_indices = @transform_4, window_bounds = array<i64: 10, 16>}, {pipeline_mode = #tpu.pipeline_mode<synchronous>, transform_indices = @transform_5, window_bounds = array<i64: 10, 1>}, {transform_indices = @transform_6, window_bounds = array<i64: 10, 8>}]} {
    %c0 = arith.constant 0 : index
    %c0_0 = arith.constant 0 : index
    %0 = vector.load %arg1[%c0, %c0_0] : memref<10x8xf32, #tpu.memory_space<vmem>>, vector<10x8xf32>
    %c0_1 = arith.constant 0 : index
    %c0_2 = arith.constant 0 : index
    %1 = vector.load %arg2[%c0_1, %c0_2] : memref<4x10xf32, #tpu.memory_space<vmem>>, vector<4x10xf32>
    %cst = arith.constant dense<0.000000e+00> : vector<4x8xf32>
    %2 = tpu.matmul %1, %0, %cst {dimension_numbers = #tpu.dot_dimension_numbers<[1], [0], [0], [1], [0, 0, 1, 1], [], []>} : vector<4x10xf32>, vector<10x8xf32>, vector<4x8xf32> -> vector<4x8xf32>
    %c0_3 = arith.constant 0 : index
    %c0_4 = arith.constant 0 : index
    %3 = vector.load %arg3[%c0_3, %c0_4] : memref<4x1xf32, #tpu.memory_space<vmem>>, vector<4x1xf32>
    %4 = vector.broadcast %3 : vector<4x1xf32> to vector<4x8xf32>
    %5 = arith.addf %2, %4 : vector<4x8xf32>
    %cst_5 = arith.constant 0.000000e+00 : f32
    %6 = vector.broadcast %cst_5 : f32 to vector<4x8xf32>
    %7 = arith.maximumf %5, %6 : vector<4x8xf32>
    %cst_6 = arith.constant 5.000000e-01 : f32
    %8 = vector.broadcast %cst_6 : f32 to vector<4x8xf32>
    %9 = arith.mulf %8, %7 : vector<4x8xf32>
    %10 = math.cos %9 : vector<4x8xf32>
    %cst_7 = arith.constant 5.000000e-01 : f32
    %11 = vector.broadcast %cst_7 : f32 to vector<4x8xf32>
    %12 = arith.mulf %11, %7 : vector<4x8xf32>
    %13 = math.sin %12 : vector<4x8xf32>
    %14 = tpu.iota {dimensions = array<i32: 0>} : vector<16x1xi32>
    %c3_i32 = arith.constant 3 : i32
    %15 = vector.broadcast %c3_i32 : i32 to vector<16x1xi32>
    %16 = arith.shrsi %14, %15 : vector<16x1xi32>
    %c1_i32 = arith.constant 1 : i32
    %17 = vector.broadcast %c1_i32 : i32 to vector<16x1xi32>
    %18 = arith.andi %16, %17 : vector<16x1xi32>
    %19 = arith.sitofp %18 : vector<16x1xi32> to vector<16x1xf32>
    %20 = vector.extract_strided_slice %10 {offsets = [0, 0], sizes = [1, 8], strides = [1, 1]} : vector<4x8xf32> to vector<1x8xf32>
    %21 = vector.extract_strided_slice %13 {offsets = [0, 0], sizes = [1, 8], strides = [1, 1]} : vector<4x8xf32> to vector<1x8xf32>
    %22 = arith.subf %21, %20 : vector<1x8xf32>
    %23 = vector.broadcast %19 : vector<16x1xf32> to vector<16x8xf32>
    %24 = vector.broadcast %22 : vector<1x8xf32> to vector<16x8xf32>
    %25 = arith.mulf %23, %24 : vector<16x8xf32>
    %26 = vector.broadcast %20 : vector<1x8xf32> to vector<16x8xf32>
    %27 = arith.addf %26, %25 : vector<16x8xf32>
    %c2_i32 = arith.constant 2 : i32
    %28 = vector.broadcast %c2_i32 : i32 to vector<16x1xi32>
    %29 = arith.shrsi %14, %28 : vector<16x1xi32>
    %c1_i32_8 = arith.constant 1 : i32
    %30 = vector.broadcast %c1_i32_8 : i32 to vector<16x1xi32>
    %31 = arith.andi %29, %30 : vector<16x1xi32>
    %32 = arith.sitofp %31 : vector<16x1xi32> to vector<16x1xf32>
    %33 = vector.extract_strided_slice %10 {offsets = [1, 0], sizes = [1, 8], strides = [1, 1]} : vector<4x8xf32> to vector<1x8xf32>
    %34 = vector.extract_strided_slice %13 {offsets = [1, 0], sizes = [1, 8], strides = [1, 1]} : vector<4x8xf32> to vector<1x8xf32>
    %35 = arith.subf %34, %33 : vector<1x8xf32>
    %36 = vector.broadcast %32 : vector<16x1xf32> to vector<16x8xf32>
    %37 = vector.broadcast %35 : vector<1x8xf32> to vector<16x8xf32>
    %38 = arith.mulf %36, %37 : vector<16x8xf32>
    %39 = vector.broadcast %33 : vector<1x8xf32> to vector<16x8xf32>
    %40 = arith.addf %39, %38 : vector<16x8xf32>
    %41 = arith.mulf %27, %40 : vector<16x8xf32>
    %c1_i32_9 = arith.constant 1 : i32
    %42 = vector.broadcast %c1_i32_9 : i32 to vector<16x1xi32>
    %43 = arith.shrsi %14, %42 : vector<16x1xi32>
    %c1_i32_10 = arith.constant 1 : i32
    %44 = vector.broadcast %c1_i32_10 : i32 to vector<16x1xi32>
    %45 = arith.andi %43, %44 : vector<16x1xi32>
    %46 = arith.sitofp %45 : vector<16x1xi32> to vector<16x1xf32>
    %47 = vector.extract_strided_slice %10 {offsets = [2, 0], sizes = [1, 8], strides = [1, 1]} : vector<4x8xf32> to vector<1x8xf32>
    %48 = vector.extract_strided_slice %13 {offsets = [2, 0], sizes = [1, 8], strides = [1, 1]} : vector<4x8xf32> to vector<1x8xf32>
    %49 = arith.subf %48, %47 : vector<1x8xf32>
    %50 = vector.broadcast %46 : vector<16x1xf32> to vector<16x8xf32>
    %51 = vector.broadcast %49 : vector<1x8xf32> to vector<16x8xf32>
    %52 = arith.mulf %50, %51 : vector<16x8xf32>
    %53 = vector.broadcast %47 : vector<1x8xf32> to vector<16x8xf32>
    %54 = arith.addf %53, %52 : vector<16x8xf32>
    %55 = arith.mulf %41, %54 : vector<16x8xf32>
    %c0_i32 = arith.constant 0 : i32
    %56 = vector.broadcast %c0_i32 : i32 to vector<16x1xi32>
    %57 = arith.shrsi %14, %56 : vector<16x1xi32>
    %c1_i32_11 = arith.constant 1 : i32
    %58 = vector.broadcast %c1_i32_11 : i32 to vector<16x1xi32>
    %59 = arith.andi %57, %58 : vector<16x1xi32>
    %60 = arith.sitofp %59 : vector<16x1xi32> to vector<16x1xf32>
    %61 = vector.extract_strided_slice %10 {offsets = [3, 0], sizes = [1, 8], strides = [1, 1]} : vector<4x8xf32> to vector<1x8xf32>
    %62 = vector.extract_strided_slice %13 {offsets = [3, 0], sizes = [1, 8], strides = [1, 1]} : vector<4x8xf32> to vector<1x8xf32>
    %63 = arith.subf %62, %61 : vector<1x8xf32>
    %64 = vector.broadcast %60 : vector<16x1xf32> to vector<16x8xf32>
    %65 = vector.broadcast %63 : vector<1x8xf32> to vector<16x8xf32>
    %66 = arith.mulf %64, %65 : vector<16x8xf32>
    %67 = vector.broadcast %61 : vector<1x8xf32> to vector<16x8xf32>
    %68 = arith.addf %67, %66 : vector<16x8xf32>
    %69 = arith.mulf %55, %68 : vector<16x8xf32>
    %c0_12 = arith.constant 0 : index
    %c0_13 = arith.constant 0 : index
    %70 = vector.load %arg4[%c0_12, %c0_13] : memref<32x16xf32, #tpu.memory_space<vmem>>, vector<32x16xf32>
    %cst_14 = arith.constant dense<0.000000e+00> : vector<32x8xf32>
    %71 = tpu.matmul %70, %69, %cst_14 {dimension_numbers = #tpu.dot_dimension_numbers<[1], [0], [0], [1], [0, 0, 1, 1], [], []>} : vector<32x16xf32>, vector<16x8xf32>, vector<32x8xf32> -> vector<32x8xf32>
    %72 = arith.mulf %71, %71 : vector<32x8xf32>
    %73 = vector.extract_strided_slice %72 {offsets = [0, 0], sizes = [16, 8], strides = [1, 1]} : vector<32x8xf32> to vector<16x8xf32>
    %74 = vector.extract_strided_slice %72 {offsets = [16, 0], sizes = [16, 8], strides = [1, 1]} : vector<32x8xf32> to vector<16x8xf32>
    %75 = arith.addf %73, %74 : vector<16x8xf32>
    %c0_15 = arith.constant 0 : index
    %c0_16 = arith.constant 0 : index
    %76 = vector.load %arg5[%c0_15, %c0_16] : memref<10x16xf32, #tpu.memory_space<vmem>>, vector<10x16xf32>
    %cst_17 = arith.constant dense<0.000000e+00> : vector<10x8xf32>
    %77 = tpu.matmul %76, %75, %cst_17 {dimension_numbers = #tpu.dot_dimension_numbers<[1], [0], [0], [1], [0, 0, 1, 1], [], []>} : vector<10x16xf32>, vector<16x8xf32>, vector<10x8xf32> -> vector<10x8xf32>
    %c0_18 = arith.constant 0 : index
    %c0_19 = arith.constant 0 : index
    %78 = vector.load %arg6[%c0_18, %c0_19] : memref<10x1xf32, #tpu.memory_space<vmem>>, vector<10x1xf32>
    %79 = vector.broadcast %78 : vector<10x1xf32> to vector<10x8xf32>
    %80 = arith.addf %77, %79 : vector<10x8xf32>
    %c0_20 = arith.constant 0 : index
    %c0_21 = arith.constant 0 : index
    %81 = vector.load %arg7[%c0_20, %c0_21] : memref<10x8xf32, #tpu.memory_space<vmem>>, vector<10x8xf32>
    tpu.vector_store %arg7[%c0_20, %c0_21], %80 {strides = array<i32>} : memref<10x8xf32, #tpu.memory_space<vmem>>, vector<10x8xf32>,
    return
  }
  func.func @transform_0(%arg0: i32) -> (i32, i32) {
    %c0_i32 = arith.constant 0 : i32
    %c0_i32_0 = arith.constant 0 : i32
    return %c0_i32, %arg0 : i32, i32
  }
  func.func @transform_1(%arg0: i32) -> (i32, i32) {
    %c0_i32 = arith.constant 0 : i32
    %c0_i32_0 = arith.constant 0 : i32
    %c0_i32_1 = arith.constant 0 : i32
    return %c0_i32, %c0_i32_0 : i32, i32
  }
  func.func @transform_2(%arg0: i32) -> (i32, i32) {
    %c0_i32 = arith.constant 0 : i32
    %c0_i32_0 = arith.constant 0 : i32
    %c0_i32_1 = arith.constant 0 : i32
    return %c0_i32, %c0_i32_0 : i32, i32
  }
  func.func @transform_3(%arg0: i32) -> (i32, i32) {
    %c0_i32 = arith.constant 0 : i32
    %c0_i32_0 = arith.constant 0 : i32
    %c0_i32_1 = arith.constant 0 : i32
    return %c0_i32, %c0_i32_0 : i32, i32
  }
  func.func @transform_4(%arg0: i32) -> (i32, i32) {
    %c0_i32 = arith.constant 0 : i32
    %c0_i32_0 = arith.constant 0 : i32
    %c0_i32_1 = arith.constant 0 : i32
    return %c0_i32, %c0_i32_0 : i32, i32
  }
  func.func @transform_5(%arg0: i32) -> (i32, i32) {
    %c0_i32 = arith.constant 0 : i32
    %c0_i32_0 = arith.constant 0 : i32
    %c0_i32_1 = arith.constant 0 : i32
    return %c0_i32, %c0_i32_0 : i32, i32
  }
  func.func @transform_6(%arg0: i32) -> (i32, i32) {
    %c0_i32 = arith.constant 0 : i32
    %c0_i32_0 = arith.constant 0 : i32
    return %c0_i32, %arg0 : i32, i32
  }
}

</mosaic_0001>

<llo_original>
// kernel: tpu_custom_call.1
$region0: #{tpu_custom_call.1}
  #allocation0 [shape = 'u32[]', space=smem, size = 0x4, offset = 0x4, fixed_abs, tag = 'smem constant byte address 0x4 - core index']
  #allocation1 [shape = 'u32[144,128]{1,0:T(1,128)}', space=vmem, size = 0x12000, scoped, tag = 'internal scratch']
  %s0 = inlined_call_operand.vmem [shape: f32[10,8], index: 0, kind: input, shape index: {}]
  %s1 = inlined_call_operand.vmem [shape: f32[4,10], index: 1, kind: input, shape index: {}]
  %s2 = inlined_call_operand.vmem [shape: f32[4,1], index: 2, kind: input, shape index: {}]
  %s3 = inlined_call_operand.vmem [shape: f32[32,16], index: 3, kind: input, shape index: {}]
  %s4 = inlined_call_operand.vmem [shape: f32[10,16], index: 4, kind: input, shape index: {}]
  %s5 = inlined_call_operand.vmem [shape: f32[10,1], index: 5, kind: input, shape index: {}]
  %s6 = inlined_call_operand.vmem [shape: f32[10,8], index: 6, kind: output, shape index: {}]
  %s7 = sld [smem:[#allocation0]]
  $region34: #{tpu_custom_call.1} parent=0
    _
  %s9 = ssub.s32 1, %s7
  %s10 = scalar_select 0, %s9, %s7
  // Predicated region
  $region2: #{tpu_custom_call.1} parent=0 // pred_check
    _
  $region3: #{tpu_custom_call.1} parent=0 // pred_check_branch
    %12 = sbr.rel (0) target = $region5
  $region4: #{tpu_custom_call.1} parent=0 // pred_region
    _
  $region5: #{tpu_custom_call.1} parent=0 // pred_fallthru
    _
  // Predicated region
  $region6: #{tpu_custom_call.1} parent=0 // pred_check
    _
  $region7: #{tpu_custom_call.1} parent=0 // pred_check_branch
    %14 = sbr.rel (0) target = $region9
  $region8: #{tpu_custom_call.1} parent=0 // pred_region
    _
  $region9: #{tpu_custom_call.1} parent=0 // pred_fallthru
    _
  // Predicated region
  $region10: #{tpu_custom_call.1} parent=0 // pred_check
    _
  $region11: #{tpu_custom_call.1} parent=0 // pred_check_branch
    %16 = sbr.rel (0) target = $region13
  $region12: #{tpu_custom_call.1} parent=0 // pred_region
    _
  $region13: #{tpu_custom_call.1} parent=0 // pred_fallthru
    _
  // Predicated region
  $region14: #{tpu_custom_call.1} parent=0 // pred_check
    _
  $region15: #{tpu_custom_call.1} parent=0 // pred_check_branch
    %18 = sbr.rel (0) target = $region17
  $region16: #{tpu_custom_call.1} parent=0 // pred_region
    _
  $region17: #{tpu_custom_call.1} parent=0 // pred_fallthru
    _
  // Predicated region
  $region18: #{tpu_custom_call.1} parent=0 // pred_check
    _
  $region19: #{tpu_custom_call.1} parent=0 // pred_check_branch
    %20 = sbr.rel (0) target = $region21
  $region20: #{tpu_custom_call.1} parent=0 // pred_region
    _
  $region21: #{tpu_custom_call.1} parent=0 // pred_fallthru
    _
  // Predicated region
  $region22: #{tpu_custom_call.1} parent=0 // pred_check
    _
  $region23: #{tpu_custom_call.1} parent=0 // pred_check_branch
    %22 = sbr.rel (0) target = $region25
  $region24: #{tpu_custom_call.1} parent=0 // pred_region
    _
  $region25: #{tpu_custom_call.1} parent=0 // pred_fallthru
    _
  %v23 = vld [vmem:[%s0] sm:$0xff]
  %v24 = vld [vmem:[%s0 + $0x8] sm:$0x3]
  %v25 = vld [vmem:[%s1] sm:$0xf]
  %v26 = vld [vmem:[%s2] sm:$0xf]
  %28 = vset.pattern.permute.xlu0 0
  %29 = vperm.xlu0 %28, %v26
  %v30 = vpop.permute.xlu0 %29
  %vm32 = vcmask 80896
  %v34 = vsel %vm32, %v25, 0
  %vm36 = vcmask 1041408
  %v38 = vsel %vm36, %v24, 0
  %40 = vmatprep.subr.mxu0 0.0
  %41 = vmatpush1.msra.mxu0 %v23
  %42 = vmatprep.subr.mxu0 0.0
  %43 = vmatpush1.msra.mxu0 %v38
  %44 = vmatprep.subr.mxu0 0.0
  %45 = vmatpush1.msra.mxu0 0.0
  %46 = vmatprep.subr.mxu0 0.0
  %47 = vmatpush1.msra.mxu0 0.0
  %48 = vmatprep.subr.mxu0 0.0
  %49 = vmatpush1.msra.mxu0 0.0
  %50 = vmatprep.subr.mxu0 0.0
  %51 = vmatpush1.msra.mxu0 0.0
  %52 = vmatprep.subr.mxu0 0.0
  %53 = vmatpush1.msra.mxu0 0.0
  %54 = vmatprep.subr.mxu0 0.0
  %55 = vmatpush1.msra.mxu0 0.0
  %56 = vmatprep.subr.mxu0 0.0
  %57 = vmatpush1.msra.mxu0 0.0
  %58 = vmatprep.subr.mxu0 0.0
  %59 = vmatpush1.msra.mxu0 0.0
  %60 = vmatprep.subr.mxu0 0.0
  %61 = vmatpush1.msra.mxu0 0.0
  %62 = vmatprep.subr.mxu0 0.0
  %63 = vmatpush1.msra.mxu0 0.0
  %64 = vmatprep.subr.mxu0 0.0
  %65 = vmatpush1.msra.mxu0 0.0
  %66 = vmatprep.subr.mxu0 0.0
  %67 = vmatpush1.msra.mxu0 0.0
  %68 = vmatprep.subr.mxu0 0.0
  %69 = vmatpush1.msra.mxu0 0.0
  %70 = vmatprep.subr.mxu0 0.0
  %71 = vmatpush1.msra.mxu0 0.0
  %72 = vmatprep.subr.mxu0 0.0
  %73 = vmatpush1.msra.mxu0 0.0
  %74 = vmatprep.subr.mxu0 0.0
  %75 = vmatpush1.msra.mxu0 0.0
  %76 = vmatprep.subr.mxu0 0.0
  %77 = vmatpush1.msra.mxu0 0.0
  %78 = vmatprep.subr.mxu0 0.0
  %79 = vmatpush1.msra.mxu0 0.0
  %80 = vmatprep.subr.mxu0 0.0
  %81 = vmatpush1.msra.mxu0 0.0
  %82 = vmatprep.subr.mxu0 0.0
  %83 = vmatpush1.msra.mxu0 0.0
  %84 = vmatprep.subr.mxu0 0.0
  %85 = vmatpush1.msra.mxu0 0.0
  %86 = vmatprep.subr.mxu0 0.0
  %87 = vmatpush1.msra.mxu0 0.0
  %88 = vmatprep.subr.mxu0 0.0
  %89 = vmatpush1.msra.mxu0 0.0
  %90 = vmatprep.subr.mxu0 0.0
  %91 = vmatpush1.msra.mxu0 0.0
  %92 = vmatprep.subr.mxu0 0.0
  %93 = vmatpush1.msra.mxu0 0.0
  %94 = vmatprep.subr.mxu0 0.0
  %95 = vmatpush1.msra.mxu0 0.0
  %96 = vmatprep.subr.mxu0 0.0
  %97 = vmatpush1.msra.mxu0 0.0
  %98 = vmatprep.subr.mxu0 0.0
  %99 = vmatpush1.msra.mxu0 0.0
  %100 = vmatprep.subr.mxu0 0.0
  %101 = vmatpush1.msra.mxu0 0.0
  %102 = vmatprep.subr.mxu0 0.0
  %103 = vmatpush1.msra.mxu0 0.0
  %104 = vmatprep.mubr.f32.mxu0 0.0
  %105 = vmatmul.mubr.f32.gmra.mrb[0].mxu0 %v34
  %v106 = vpop.f32.mrb[0].mxu0
  %v107 = vadd.f32 %v30, %v106
  %v108 = vpop.f32.mrb[0].mxu0
  %109 = vdwg.mxu0
  %v110 = vmax.f32 %v107, 0.0
  %v111 = vmul.f32 %v110, 0.5
  %v112 = vand.u32 2147483647, %v111
  %vm113 = vcmp.le.f32.partialorder %v112, 0.7853982
  %vm114 = vcmp.lt.s32.totalorder %v111, 0
  %v115 = vand.u32 %v111, 2139095040
  %v116 = vshrl.u32 %v115, 23
  %v117 = vsub.s32 %v116, 127
  %v118 = vand.u32 2147483647, %v111
  %v119 = vand.u32 %v118, 8388607
  %v120 = vor.u32 %v119, 8388608
  %v121 = vsub.s32 0, %v120
  %v122 = vadd.s32 %v117, 1
  %vm123 = vcmp.gt.s32.totalorder %v122, 0
  %v124 = vsel %vm123, %v122, 0
  %v125 = vshrl.u32 %v124, 5
  %v126 = vand.u32 %v124, 31
  %v127 = vsub.s32 32, %v126
  %v128 = vshrl.u32 683565275, %v127
  %v129 = vshll.u32 683565275, %v126
  %v130 = vshrl.u32 2475754826, %v127
  %v131 = vor.u32 %v129, %v130
  %v132 = vshll.u32 2475754826, %v126
  %v133 = vshrl.u32 2131351028, %v127
  %v134 = vor.u32 %v132, %v133
  %v135 = vshll.u32 2131351028, %v126
  %v136 = vshrl.u32 2102212464, %v127
  %v137 = vor.u32 %v135, %v136
  %v138 = vshll.u32 2102212464, %v126
  %v139 = vshrl.u32 920167782, %v127
  %v140 = vor.u32 %v138, %v139
  %v141 = vshll.u32 920167782, %v126
  %v142 = vshrl.u32 1326507024, %v127
  %v143 = vor.u32 %v141, %v142
  %vm144 = vcmp.lt.s32.totalorder %v125, 1
  %vm145 = vcmp.lt.s32.totalorder %v125, 2
  %vm146 = vcmp.lt.s32.totalorder %v125, 3
  %vm147 = vcmp.lt.s32.totalorder %v125, 4
  %v148 = vsel %vm144, %v128, %v131
  %v149 = vsel %vm147, %v137, 2102212464
  %v150 = vsel %vm146, %v134, %v149
  %v151 = vsel %vm145, %v148, %v150
  %v152 = vsel %vm144, %v131, %v134
  %v153 = vsel %vm147, %v140, 920167782
  %v154 = vsel %vm146, %v137, %v153
  %v155 = vsel %vm145, %v152, %v154
  %v156 = vsel %vm144, %v134, %v137
  %v157 = vsel %vm147, %v143, 1326507024
  %v158 = vsel %vm146, %v140, %v157
  %v159 = vsel %vm145, %v156, %v158
  %v160 = vshll.u32 %v120, 8
  %v161 = vmul.u32.u64.compose %v160, %v159
  %v162 = vextract.low.u32 %v161
  %v163 = vextract.high.u32 %v161
  %v164 = vmul.u32.u64.compose %v160, %v155
  %v165 = vextract.low.u32 %v164
  %v166 = vextract.high.u32 %v164
  %v167 = vmul.u32 %v160, %v151
  %v168 = vadd.s32 %v163, %v165
  %vm169 = vc.u32 %v163, %v165
  %v170 = vadd.s32 %v166, 1
  %v171 = vsel %vm169, %v170, %v166
  %v172 = vadd.s32 %v167, %v171
  %v173 = vadd.s32 %v172, 536870912
  %v174 = vshrl.u32 %v173, 30
  %v175 = vshll.u32 %v174, 30
  %v176 = vsub.s32 %v172, %v175
  %vm177 = vcmp.lt.s32.totalorder %v176, 0
  %v178 = vsub.s32 0, %v176
  %v179 = vsel %vm177, %v178, %v176
  %v180 = vclz %v179
  %v181 = vsub.s32 %v180, 2
  %vm182 = vcmp.gt.s32.totalorder 0, %v181
  %v183 = vsel %vm182, 0, %v181
  %v184 = vsub.s32 32, %v183
  %v185 = vshll.u32 %v176, %v183
  %v186 = vshrl.u32 %v168, %v184
  %v187 = vor.u32 %v185, %v186
  %v188 = vsub.s32 4294967266, %v183
  %v189 = vadd.s32 %v188, 127
  %v190 = vshll.u32 %v189, 23
  %v191 = vor.u32 4788187, %v190
  %v192 = vand.u32 2147483647, %v191
  %v194 = vcvt.s32.f32 %v187
  %v195 = vmul.f32 %v194, %v192
  %v196 = vxor.u32 %v195, 2147483648
  %v197 = vsel %vm114, %v196, %v195
  %v198 = vsub.s32 4, %v174
  %v199 = vsel %vm114, %v198, %v174
  %v200 = vsel %vm113, %v111, %v197
  %v201 = vsel %vm113, 0, %v199
  %v202 = vcosq.f32.pop %v200
  %v203 = vsinq.f32.pop %v200
  %vm204 = vweird.f32 %v111
  %v205 = vand.u32 %v201, 3
  %vm206 = vcmp.lt.s32.totalorder %v205, 2
  %vm207 = vcmp.eq.s32.totalorder %v205, 0
  %v208 = vxor.u32 %v203, 2147483648
  %v209 = vsel %vm207, %v202, %v208
  %vm210 = vcmp.eq.s32.totalorder %v205, 2
  %v211 = vxor.u32 %v202, 2147483648
  %v212 = vsel %vm210, %v211, %v203
  %v213 = vsel %vm206, %v209, %v212
  %v214 = vsel %vm204, nan, %v213
  %v215 = vand.u32 2147483647, %v111
  %vm216 = vcmp.le.f32.partialorder %v215, 0.7853982
  %vm217 = vcmp.lt.s32.totalorder %v111, 0
  %v218 = vand.u32 %v111, 2139095040
  %v219 = vshrl.u32 %v218, 23
  %v220 = vsub.s32 %v219, 127
  %v221 = vand.u32 2147483647, %v111
  %v222 = vand.u32 %v221, 8388607
  %v223 = vor.u32 %v222, 8388608
  %v224 = vsub.s32 0, %v223
  %v225 = vadd.s32 %v220, 1
  %vm226 = vcmp.gt.s32.totalorder %v225, 0
  %v227 = vsel %vm226, %v225, 0
  %v228 = vshrl.u32 %v227, 5
  %v229 = vand.u32 %v227, 31
  %v230 = vsub.s32 32, %v229
  %v231 = vshrl.u32 683565275, %v230
  %v232 = vshll.u32 683565275, %v229
  %v233 = vshrl.u32 2475754826, %v230
  %v234 = vor.u32 %v232, %v233
  %v235 = vshll.u32 2475754826, %v229
  %v236 = vshrl.u32 2131351028, %v230
  %v237 = vor.u32 %v235, %v236
  %v238 = vshll.u32 2131351028, %v229
  %v239 = vshrl.u32 2102212464, %v230
  %v240 = vor.u32 %v238, %v239
  %v241 = vshll.u32 2102212464, %v229
  %v242 = vshrl.u32 920167782, %v230
  %v243 = vor.u32 %v241, %v242
  %v244 = vshll.u32 920167782, %v229
  %v245 = vshrl.u32 1326507024, %v230
  %v246 = vor.u32 %v244, %v245
  %vm247 = vcmp.lt.s32.totalorder %v228, 1
  %vm248 = vcmp.lt.s32.totalorder %v228, 2
  %vm249 = vcmp.lt.s32.totalorder %v228, 3
  %vm250 = vcmp.lt.s32.totalorder %v228, 4
  %v251 = vsel %vm247, %v231, %v234
  %v252 = vsel %vm250, %v240, 2102212464
  %v253 = vsel %vm249, %v237, %v252
  %v254 = vsel %vm248, %v251, %v253
  %v255 = vsel %vm247, %v234, %v237
  %v256 = vsel %vm250, %v243, 920167782
  %v257 = vsel %vm249, %v240, %v256
  %v258 = vsel %vm248, %v255, %v257
  %v259 = vsel %vm247, %v237, %v240
  %v260 = vsel %vm250, %v246, 1326507024
  %v261 = vsel %vm249, %v243, %v260
  %v262 = vsel %vm248, %v259, %v261
  %v263 = vshll.u32 %v223, 8
  %v264 = vmul.u32.u64.compose %v263, %v262
  %v265 = vextract.low.u32 %v264
  %v266 = vextract.high.u32 %v264
  %v267 = vmul.u32.u64.compose %v263, %v258
  %v268 = vextract.low.u32 %v267
  %v269 = vextract.high.u32 %v267
  %v270 = vmul.u32 %v263, %v254
  %v271 = vadd.s32 %v266, %v268
  %vm272 = vc.u32 %v266, %v268
  %v273 = vadd.s32 %v269, 1
  %v274 = vsel %vm272, %v273, %v269
  %v275 = vadd.s32 %v270, %v274
  %v276 = vadd.s32 %v275, 536870912
  %v277 = vshrl.u32 %v276, 30
  %v278 = vshll.u32 %v277, 30
  %v279 = vsub.s32 %v275, %v278
  %vm280 = vcmp.lt.s32.totalorder %v279, 0
  %v281 = vsub.s32 0, %v279
  %v282 = vsel %vm280, %v281, %v279
  %v283 = vclz %v282
  %v284 = vsub.s32 %v283, 2
  %vm285 = vcmp.gt.s32.totalorder 0, %v284
  %v286 = vsel %vm285, 0, %v284
  %v287 = vsub.s32 32, %v286
  %v288 = vshll.u32 %v279, %v286
  %v289 = vshrl.u32 %v271, %v287
  %v290 = vor.u32 %v288, %v289
  %v291 = vsub.s32 4294967266, %v286
  %v292 = vadd.s32 %v291, 127
  %v293 = vshll.u32 %v292, 23
  %v294 = vor.u32 4788187, %v293
  %v295 = vand.u32 2147483647, %v294
  %v297 = vcvt.s32.f32 %v290
  %v298 = vmul.f32 %v297, %v295
  %v299 = vxor.u32 %v298, 2147483648
  %v300 = vsel %vm217, %v299, %v298
  %v301 = vsub.s32 4, %v277
  %v302 = vsel %vm217, %v301, %v277
  %v303 = vsel %vm216, %v111, %v300
  %v304 = vsel %vm216, 0, %v302
  %v305 = vcosq.f32.pop %v303
  %v306 = vsinq.f32.pop %v303
  %vm307 = vweird.f32 %v111
  %v308 = vadd.s32 %v304, 3
  %v309 = vand.u32 %v308, 3
  %vm310 = vcmp.lt.s32.totalorder %v309, 2
  %vm311 = vcmp.eq.s32.totalorder %v309, 0
  %v312 = vxor.u32 %v306, 2147483648
  %v313 = vsel %vm311, %v305, %v312
  %vm314 = vcmp.eq.s32.totalorder %v309, 2
  %v315 = vxor.u32 %v305, 2147483648
  %v316 = vsel %vm314, %v315, %v306
  %v317 = vsel %vm310, %v313, %v316
  %v318 = vsel %vm307, nan, %v317
  %v319 = vlaneseq
  %v320 = vshrl.u32 %v319, 7
  %v321 = vadd.s32 %v320, 8
  %v322 = vshra.s32 %v320, 3
  %v323 = vshra.s32 %v321, 3
  %v324 = vand.u32 %v322, 1
  %v325 = vand.u32 %v323, 1
  %v326 = vcvt.s32.f32 %v324
  %v327 = vcvt.s32.f32 %v325
  %v328 = vsub.f32 %v318, %v214
  %v329 = vlaneseq
  %v330 = vshrl.u32 %v329, 7
  %v331 = vsub.s32 0, %v330
  %v332 = vrot.slane %v328, %v331
  %v333 = vmul.f32 %v326, %v332
  %v334 = vmul.f32 %v327, %v332
  %v335 = vlaneseq
  %v336 = vshrl.u32 %v335, 7
  %v337 = vsub.s32 0, %v336
  %v338 = vrot.slane %v214, %v337
  %v339 = vadd.f32 %v338, %v333
  %v340 = vadd.f32 %v338, %v334
  %v341 = vshra.s32 %v320, 2
  %v342 = vshra.s32 %v321, 2
  %v343 = vand.u32 %v341, 1
  %v344 = vand.u32 %v342, 1
  %v345 = vcvt.s32.f32 %v343
  %v346 = vcvt.s32.f32 %v344
  %v347 = vlaneseq
  %v348 = vshrl.u32 %v347, 7
  %v349 = vsub.s32 1, %v348
  %v350 = vrot.slane %v328, %v349
  %v351 = vmul.f32 %v345, %v350
  %v352 = vmul.f32 %v346, %v350
  %v353 = vlaneseq
  %v354 = vshrl.u32 %v353, 7
  %v355 = vsub.s32 1, %v354
  %v356 = vrot.slane %v214, %v355
  %v357 = vadd.f32 %v356, %v351
  %v358 = vadd.f32 %v356, %v352
  %v359 = vmul.f32 %v339, %v357
  %v360 = vmul.f32 %v340, %v358
  %v361 = vshra.s32 %v320, 1
  %v362 = vshra.s32 %v321, 1
  %v363 = vand.u32 %v361, 1
  %v364 = vand.u32 %v362, 1
  %v365 = vcvt.s32.f32 %v363
  %v366 = vcvt.s32.f32 %v364
  %v367 = vlaneseq
  %v368 = vshrl.u32 %v367, 7
  %v369 = vsub.s32 2, %v368
  %v370 = vrot.slane %v328, %v369
  %v371 = vmul.f32 %v365, %v370
  %v372 = vmul.f32 %v366, %v370
  %v373 = vlaneseq
  %v374 = vshrl.u32 %v373, 7
  %v375 = vsub.s32 2, %v374
  %v376 = vrot.slane %v214, %v375
  %v377 = vadd.f32 %v376, %v371
  %v378 = vadd.f32 %v376, %v372
  %v379 = vmul.f32 %v359, %v377
  %v380 = vmul.f32 %v360, %v378
  %v381 = vand.u32 %v320, 1
  %v382 = vand.u32 %v321, 1
  %v383 = vcvt.s32.f32 %v381
  %v384 = vcvt.s32.f32 %v382
  %v385 = vlaneseq
  %v386 = vshrl.u32 %v385, 7
  %v387 = vsub.s32 3, %v386
  %v388 = vrot.slane %v328, %v387
  %v389 = vmul.f32 %v383, %v388
  %v390 = vmul.f32 %v384, %v388
  %v391 = vlaneseq
  %v392 = vshrl.u32 %v391, 7
  %v393 = vsub.s32 3, %v392
  %v394 = vrot.slane %v214, %v393
  %v395 = vadd.f32 %v394, %v389
  %v396 = vadd.f32 %v394, %v390
  %v397 = vmul.f32 %v379, %v395
  %v398 = vmul.f32 %v380, %v396
  %v399 = vld [vmem:[%s3] sm:$0xff]
  %v400 = vld [vmem:[%s3 + $0x8] sm:$0xff]
  %v401 = vld [vmem:[%s3 + $0x10] sm:$0xff]
  %v402 = vld [vmem:[%s3 + $0x18] sm:$0xff]
  %vm403 = vcmask 130048
  %v405 = vsel %vm403, %v399, 0
  %v408 = vsel %vm403, %v400, 0
  %v411 = vsel %vm403, %v401, 0
  %v414 = vsel %vm403, %v402, 0
  %416 = vmatprep.subr.mxu0 0.0
  %417 = vmatpush1.msra.mxu0 %v397
  %418 = vmatprep.subr.mxu0 0.0
  %419 = vmatpush1.msra.mxu0 %v398
  %420 = vmatprep.subr.mxu0 0.0
  %421 = vmatpush1.msra.mxu0 0.0
  %422 = vmatprep.subr.mxu0 0.0
  %423 = vmatpush1.msra.mxu0 0.0
  %424 = vmatprep.subr.mxu0 0.0
  %425 = vmatpush1.msra.mxu0 0.0
  %426 = vmatprep.subr.mxu0 0.0
  %427 = vmatpush1.msra.mxu0 0.0
  %428 = vmatprep.subr.mxu0 0.0
  %429 = vmatpush1.msra.mxu0 0.0
  %430 = vmatprep.subr.mxu0 0.0
  %431 = vmatpush1.msra.mxu0 0.0
  %432 = vmatprep.subr.mxu0 0.0
  %433 = vmatpush1.msra.mxu0 0.0
  %434 = vmatprep.subr.mxu0 0.0
  %435 = vmatpush1.msra.mxu0 0.0
  %436 = vmatprep.subr.mxu0 0.0
  %437 = vmatpush1.msra.mxu0 0.0
  %438 = vmatprep.subr.mxu0 0.0
  %439 = vmatpush1.msra.mxu0 0.0
  %440 = vmatprep.subr.mxu0 0.0
  %441 = vmatpush1.msra.mxu0 0.0
  %442 = vmatprep.subr.mxu0 0.0
  %443 = vmatpush1.msra.mxu0 0.0
  %444 = vmatprep.subr.mxu0 0.0
  %445 = vmatpush1.msra.mxu0 0.0
  %446 = vmatprep.subr.mxu0 0.0
  %447 = vmatpush1.msra.mxu0 0.0
  %448 = vmatprep.subr.mxu0 0.0
  %449 = vmatpush1.msra.mxu0 0.0
  %450 = vmatprep.subr.mxu0 0.0
  %451 = vmatpush1.msra.mxu0 0.0
  %452 = vmatprep.subr.mxu0 0.0
  %453 = vmatpush1.msra.mxu0 0.0
  %454 = vmatprep.subr.mxu0 0.0
  %455 = vmatpush1.msra.mxu0 0.0
  %456 = vmatprep.subr.mxu0 0.0
  %457 = vmatpush1.msra.mxu0 0.0
  %458 = vmatprep.subr.mxu0 0.0
  %459 = vmatpush1.msra.mxu0 0.0
  %460 = vmatprep.subr.mxu0 0.0
  %461 = vmatpush1.msra.mxu0 0.0
  %462 = vmatprep.subr.mxu0 0.0
  %463 = vmatpush1.msra.mxu0 0.0
  %464 = vmatprep.subr.mxu0 0.0
  %465 = vmatpush1.msra.mxu0 0.0
  %466 = vmatprep.subr.mxu0 0.0
  %467 = vmatpush1.msra.mxu0 0.0
  %468 = vmatprep.subr.mxu0 0.0
  %469 = vmatpush1.msra.mxu0 0.0
  %470 = vmatprep.subr.mxu0 0.0
  %471 = vmatpush1.msra.mxu0 0.0
  %472 = vmatprep.subr.mxu0 0.0
  %473 = vmatpush1.msra.mxu0 0.0
  %474 = vmatprep.subr.mxu0 0.0
  %475 = vmatpush1.msra.mxu0 0.0
  %476 = vmatprep.subr.mxu0 0.0
  %477 = vmatpush1.msra.mxu0 0.0
  %478 = vmatprep.subr.mxu0 0.0
  %479 = vmatpush1.msra.mxu0 0.0
  %480 = vmatprep.mubr.f32.mxu0 0.0
  %481 = vmatmul.mubr.f32.gmra.mrb[0].mxu0 %v405
  %v482 = vpop.f32.mrb[0].mxu0
  %v483 = vadd.f32 0.0, %v482
  %v484 = vpop.f32.mrb[0].mxu0
  %485 = vmatprep.mubr.f32.mxu0 0.0
  %486 = vmatmul.mubr.f32.gmra.mrb[0].mxu0 %v408
  %v487 = vpop.f32.mrb[0].mxu0
  %v488 = vadd.f32 0.0, %v487
  %v489 = vpop.f32.mrb[0].mxu0
  %490 = vmatprep.mubr.f32.mxu0 0.0
  %491 = vmatmul.mubr.f32.gmra.mrb[0].mxu0 %v411
  %v492 = vpop.f32.mrb[0].mxu0
  %v493 = vadd.f32 0.0, %v492
  %v494 = vpop.f32.mrb[0].mxu0
  %495 = vmatprep.mubr.f32.mxu0 0.0
  %496 = vmatmul.mubr.f32.gmra.mrb[0].mxu0 %v414
  %v497 = vpop.f32.mrb[0].mxu0
  %v498 = vadd.f32 0.0, %v497
  %v499 = vpop.f32.mrb[0].mxu0
  %500 = vdwg.mxu0
  %v501 = vmul.f32 %v483, %v483
  %v502 = vmul.f32 %v488, %v488
  %v503 = vmul.f32 %v493, %v493
  %v504 = vmul.f32 %v498, %v498
  %v505 = vadd.f32 %v501, %v503
  %v506 = vadd.f32 %v502, %v504
  %v507 = vld [vmem:[%s4] sm:$0xff]
  %v508 = vld [vmem:[%s4 + $0x8] sm:$0x3]
  %v509 = vld [vmem:[%s5] sm:$0xff]
  %v510 = vld [vmem:[%s5 + $0x8] sm:$0x3]
  %512 = vset.pattern.permute.xlu0 0
  %513 = vperm.xlu0 %512, %v509
  %v514 = vpop.permute.xlu0 %513
  %517 = vset.pattern.permute.xlu0 0
  %518 = vperm.xlu0 %517, %v510
  %v519 = vpop.permute.xlu0 %518
  %v522 = vsel %vm403, %v507, 0
  %v525 = vsel %vm403, %v508, 0
  %527 = vmatprep.subr.mxu0 0.0
  %528 = vmatpush1.msra.mxu0 %v505
  %529 = vmatprep.subr.mxu0 0.0
  %530 = vmatpush1.msra.mxu0 %v506
  %531 = vmatprep.subr.mxu0 0.0
  %532 = vmatpush1.msra.mxu0 0.0
  %533 = vmatprep.subr.mxu0 0.0
  %534 = vmatpush1.msra.mxu0 0.0
  %535 = vmatprep.subr.mxu0 0.0
  %536 = vmatpush1.msra.mxu0 0.0
  %537 = vmatprep.subr.mxu0 0.0
  %538 = vmatpush1.msra.mxu0 0.0
  %539 = vmatprep.subr.mxu0 0.0
  %540 = vmatpush1.msra.mxu0 0.0
  %541 = vmatprep.subr.mxu0 0.0
  %542 = vmatpush1.msra.mxu0 0.0
  %543 = vmatprep.subr.mxu0 0.0
  %544 = vmatpush1.msra.mxu0 0.0
  %545 = vmatprep.subr.mxu0 0.0
  %546 = vmatpush1.msra.mxu0 0.0
  %547 = vmatprep.subr.mxu0 0.0
  %548 = vmatpush1.msra.mxu0 0.0
  %549 = vmatprep.subr.mxu0 0.0
  %550 = vmatpush1.msra.mxu0 0.0
  %551 = vmatprep.subr.mxu0 0.0
  %552 = vmatpush1.msra.mxu0 0.0
  %553 = vmatprep.subr.mxu0 0.0
  %554 = vmatpush1.msra.mxu0 0.0
  %555 = vmatprep.subr.mxu0 0.0
  %556 = vmatpush1.msra.mxu0 0.0
  %557 = vmatprep.subr.mxu0 0.0
  %558 = vmatpush1.msra.mxu0 0.0
  %559 = vmatprep.subr.mxu0 0.0
  %560 = vmatpush1.msra.mxu0 0.0
  %561 = vmatprep.subr.mxu0 0.0
  %562 = vmatpush1.msra.mxu0 0.0
  %563 = vmatprep.subr.mxu0 0.0
  %564 = vmatpush1.msra.mxu0 0.0
  %565 = vmatprep.subr.mxu0 0.0
  %566 = vmatpush1.msra.mxu0 0.0
  %567 = vmatprep.subr.mxu0 0.0
  %568 = vmatpush1.msra.mxu0 0.0
  %569 = vmatprep.subr.mxu0 0.0
  %570 = vmatpush1.msra.mxu0 0.0
  %571 = vmatprep.subr.mxu0 0.0
  %572 = vmatpush1.msra.mxu0 0.0
  %573 = vmatprep.subr.mxu0 0.0
  %574 = vmatpush1.msra.mxu0 0.0
  %575 = vmatprep.subr.mxu0 0.0
  %576 = vmatpush1.msra.mxu0 0.0
  %577 = vmatprep.subr.mxu0 0.0
  %578 = vmatpush1.msra.mxu0 0.0
  %579 = vmatprep.subr.mxu0 0.0
  %580 = vmatpush1.msra.mxu0 0.0
  %581 = vmatprep.subr.mxu0 0.0
  %582 = vmatpush1.msra.mxu0 0.0
  %583 = vmatprep.subr.mxu0 0.0
  %584 = vmatpush1.msra.mxu0 0.0
  %585 = vmatprep.subr.mxu0 0.0
  %586 = vmatpush1.msra.mxu0 0.0
  %587 = vmatprep.subr.mxu0 0.0
  %588 = vmatpush1.msra.mxu0 0.0
  %589 = vmatprep.subr.mxu0 0.0
  %590 = vmatpush1.msra.mxu0 0.0
  %591 = vmatprep.mubr.f32.mxu0 0.0
  %592 = vmatmul.mubr.f32.gmra.mrb[0].mxu0 %v522
  %v593 = vpop.f32.mrb[0].mxu0
  %v594 = vadd.f32 %v514, %v593
  %v595 = vpop.f32.mrb[0].mxu0
  %596 = vmatprep.mubr.f32.mxu0 0.0
  %597 = vmatmul.mubr.f32.gmra.mrb[0].mxu0 %v525
  %v598 = vpop.f32.mrb[0].mxu0
  %v599 = vadd.f32 %v519, %v598
  %v600 = vpop.f32.mrb[0].mxu0
  %601 = vdwg.mxu0
  %vm602 = vcmask 64512
  %603 = vst.msk [vmem:[%s6] sm:$0xff] %vm602, %v594
  %vm604 = vcmask 58368
  %605 = vst.msk [vmem:[%s6 + $0x8] sm:$0x3] %vm604, %v599
  // Predicated region
  $region26: #{tpu_custom_call.1} parent=0 // pred_check
    _
  $region27: #{tpu_custom_call.1} parent=0 // pred_check_branch
    %607 = sbr.rel (0) target = $region29
  $region28: #{tpu_custom_call.1} parent=0 // pred_region
    _
  $region29: #{tpu_custom_call.1} parent=0 // pred_fallthru
    _
  // Predicated region
  $region30: #{tpu_custom_call.1} parent=0 // pred_check
    _
  $region31: #{tpu_custom_call.1} parent=0 // pred_check_branch
    %609 = sbr.rel (0) target = $region33
  $region32: #{tpu_custom_call.1} parent=0 // pred_region
    _
  $region33: #{tpu_custom_call.1} parent=0 // pred_fallthru
    _

</llo_original>
